<compile_context>
chip_gen: v7x
topology: tpu7x:2x2x1
jax: 0.10.0
libtpu: 0.0.40
codegen_flags: <defaults>
</compile_context>

<pallas_src>
import numpy as np
import jax
import jax.numpy as jnp
from jax.experimental import pallas as pl
from jax.experimental.pallas import tpu as pltpu


def _gaussian_weights_1d(kernel_size: int) -> np.ndarray:
    """Normalized 1-D factor of the PyTorch GaussianFilter weights.

    PyTorch builds w2d[i, j] = exp(-((i-m)^2 + (j-m)^2) / (2 v)) / sum(w2d),
    which factors exactly as outer(g, g) / (sum g)^2 with
    g[i] = exp(-(i-m)^2 / (2 v)); so the separable 1-D weights are g / sum(g).
    """
    mean = (kernel_size - 1) / 2.0
    variance = (kernel_size / 6.0) ** 2.0
    coords = np.arange(kernel_size, dtype=np.float64)
    g = np.exp(-((coords - mean) ** 2.0) / (2.0 * variance))
    return g / g.sum()


def _round_up(x: int, m: int) -> int:
    return ((x + m - 1) // m) * m


def _pick_pack_factor(nc: int, w_pad: int) -> int:
    """How many channel-slices to pack along the lane axis (divisor of nc).

    Targets >= 128 active lanes (one full vreg row) while keeping >= 2 grid
    steps so the remaining batch axis can be pipelined / megacore-sharded.
    """
    target = max(1, -(-128 // w_pad))                 # ceil(128 / w_pad)
    cap = max(target, 1024 // max(w_pad, 1))          # keep lane extent sane
    best = 1
    for d in range(1, nc + 1):
        if nc % d != 0 or d > cap:
            continue
        if nc // d < 2 and nc != 1:
            continue                                   # would leave a 1-step grid
        best = d
        if d >= target:
            break
    return best


def _vmem_params():
    """(per-step VMEM budget, vmem_limit_bytes), TPU-generation aware."""
    try:
        cap = int(getattr(pltpu.get_tpu_info(), "vmem_capacity_bytes", 64 << 20))
    except Exception:
        cap = 64 << 20
    if cap >= (100 << 20):           # v5e / v6e class parts (128 MiB VMEM)
        return 28 << 20, 80 << 20
    return 14 << 20, 40 << 20        # v7x class parts (64 MiB VMEM)


def _pick_batch_tile(b: int, g: int, H: int, W: int, K: int, pad: int,
                     itemsize: int, budget_bytes: int) -> int:
    """Largest divisor of b fitting the per-step VMEM budget, keeping >= 2
    grid steps whenever b >= 2 (pipelining + v7x megacore sharding)."""
    H_pad, W_pad = H + 2 * pad, W + 2 * pad
    H_out = H_pad - K + 1
    sw = _round_up(g * W_pad, 128)

    def step_bytes(t: int) -> int:
        inp = 2 * t * g * H * W * itemsize        # double-buffered input block
        out = 2 * t * H_out * sw * itemsize       # double-buffered output slab
        scr = t * H_pad * sw * itemsize           # padded scratch
        tmp = 4 * t * H_out * sw * 4              # f32 intermediates headroom
        return inp + out + scr + tmp

    best = 1
    for t in range(1, b + 1):
        if b % t != 0:
            continue
        if b >= 2 and b // t < 2:
            continue
        if step_bytes(t) <= budget_bytes:
            best = t
    return best


def _make_kernel(w1d: np.ndarray, tile_b: int, G: int, H: int, W: int,
                 K: int, pad: int, sw: int, sdtype):
    H_pad, W_pad = H + 2 * pad, W + 2 * pad
    H_out = H_pad - K + 1
    c = (K - 1) // 2
    w = [float(v) for v in w1d]        # symmetric: w[c-d] == w[c+d]

    def kernel(x_ref, o_ref, pad_ref):
        # x_ref  : (tile_b, G, H, W)       unpadded input slices
        # o_ref  : (tile_b, H_out, sw)     lane-dense output slab
        # pad_ref: (tile_b, H_pad, sw)     zero-padded, lane-packed scratch
        #
        # Scratch layout: slice g owns lanes [g*W_pad, (g+1)*W_pad); lanes
        # [G*W_pad, sw) are an alignment tail no valid output tap ever reads.
        xb = x_ref[...].astype(sdtype)                     # (tile_b, G, H, W)

        # Halo zeroing only (no full-tile fill).  Done every grid step so the
        # kernel never depends on scratch state from another iteration
        # (megacore-safe with dimension_semantics=("parallel",)).
        if pad > 0:
            z_rows = jnp.zeros((tile_b, pad, sw), sdtype)
            pad_ref[:, 0:pad, :] = z_rows                  # top halo rows
            pad_ref[:, pad + H:H_pad, :] = z_rows          # bottom halo rows
            z_cols = jnp.zeros((tile_b, H, pad), sdtype)
        for g in range(G):
            col0 = g * W_pad
            if pad > 0:
                pad_ref[:, pad:pad + H, col0:col0 + pad] = z_cols
                pad_ref[:, pad:pad + H, col0 + pad + W:col0 + W_pad] = z_cols
            pad_ref[:, pad:pad + H, col0 + pad:col0 + pad + W] = xb[:, g]

        # ---- vertical K-tap pass (sublane-offset loads, symmetric weights) --
        def vt(d):
            return pad_ref[:, d:d + H_out, :].astype(jnp.float32)

        acc_v = w[c] * vt(c)
        for d in range(1, c + 1):
            acc_v = acc_v + w[c - d] * (vt(c - d) + vt(c + d))

        # ---- horizontal K-tap pass: centred +/-d rotate pairs (XLU slot) ----
        # For valid lane l = g*W_pad + j + c the result equals the conv output
        # of slice g at column j; rotates are paired, so the result is
        # independent of the rotate direction convention, and the circular
        # wrap only touches halo / tail lanes, never a valid output lane.
        acc = w[c] * acc_v
        for d in range(1, c + 1):
            acc = acc + w[c - d] * (pltpu.roll(acc_v, d, axis=2) +
                                    pltpu.roll(acc_v, sw - d, axis=2))

        o_ref[...] = acc.astype(o_ref.dtype)

    return kernel


def gaussian_filter(x: jax.Array, kernel_size: int = 5, stride: int = 1,
                    padding: int = 4) -> jax.Array:
    """Depthwise Gaussian blur matching the PyTorch GaussianFilter.forward."""
    assert stride == 1, "module is constructed with stride=1"
    assert kernel_size % 2 == 1, "separable symmetric path assumes odd kernel"
    N, C, H, W = x.shape
    K, pad = kernel_size, padding
    H_pad, W_pad = H + 2 * pad, W + 2 * pad
    H_out, W_out = H_pad - K + 1, W_pad - K + 1
    NC = N * C
    c = (K - 1) // 2

    w1d = _gaussian_weights_1d(K)
    G = _pick_pack_factor(NC, W_pad)          # slices packed along lanes
    B = NC // G                               # remaining batch axis
    gw = G * W_pad
    sw = _round_up(gw, 128)                   # lane-dense slab width

    budget, vmem_limit = _vmem_params()
    tile_b = _pick_batch_tile(B, G, H, W, K, pad, x.dtype.itemsize, budget)
    grid = (B // tile_b,)

    kernel = _make_kernel(w1d, tile_b, G, H, W, K, pad, sw, x.dtype)

    out_slab = pl.pallas_call(
        kernel,
        out_shape=jax.ShapeDtypeStruct((B, H_out, sw), x.dtype),
        grid_spec=pltpu.PrefetchScalarGridSpec(
            num_scalar_prefetch=0,
            grid=grid,
            in_specs=[pl.BlockSpec((tile_b, G, H, W), lambda i: (i, 0, 0, 0))],
            out_specs=pl.BlockSpec((tile_b, H_out, sw), lambda i: (i, 0, 0)),
            scratch_shapes=[pltpu.VMEM((tile_b, H_pad, sw), x.dtype)],
        ),
        compiler_params=pltpu.CompilerParams(
            dimension_semantics=("parallel",),
            vmem_limit_bytes=vmem_limit,
        ),
    )(x.reshape(B, G, H, W))

    # Valid output columns of packed slice g sit at lanes
    # [g*W_pad + c, g*W_pad + c + W_out); slicing / transposing them out here
    # is pure layout plumbing on a lane-dense slab.
    out = out_slab[:, :, :gw].reshape(B, H_out, G, W_pad)[:, :, :, c:c + W_out]
    out = out.transpose(0, 2, 1, 3).reshape(N, C, H_out, W_out)
    return out


def _reference(x, kernel_size=5, padding=4):
    """Pure-JAX reference using the exact 2D weights of the PyTorch module."""
    mean = (kernel_size - 1) / 2.0
    variance = (kernel_size / 6.0) ** 2.0
    coords = np.arange(kernel_size, dtype=np.float32)
    g = np.exp(-((coords - mean) ** 2.0) / (2.0 * variance))
    w2d = np.outer(g, g).astype(np.float32)
    w2d = w2d / w2d.sum()
    w = jnp.broadcast_to(jnp.asarray(w2d)[None, None],
                         (3, 1, kernel_size, kernel_size))
    return jax.lax.conv_general_dilated(
        x, w, window_strides=(1, 1),
        padding=[(padding, padding), (padding, padding)],
        dimension_numbers=("NCHW", "OIHW", "NCHW"),
        feature_group_count=3)


if __name__ == "__main__":
    key = jax.random.PRNGKey(0)
    # GaussianFilter is a 3-channel depthwise conv (groups=3), so C=3.
    N, C, H, W = 2, 3, 16, 16
    x = jax.random.normal(key, (N, C, H, W), dtype=jnp.float32)

    y = jax.block_until_ready(gaussian_filter(x))

    y_ref = jax.block_until_ready(_reference(x))
    assert y.shape == (N, C, H + 4, W + 4), y.shape
    np.testing.assert_allclose(np.asarray(y), np.asarray(y_ref),
                               rtol=1e-5, atol=1e-5)

    print("KERNEL_OK")
</pallas_src>

<mosaic_0001>
module attributes {stable_mosaic.version = 11 : i64} {
  func.func @kernel(%arg0: i32, %arg1: memref<1x3x16x16xf32, #tpu.memory_space<vmem>>, %arg2: memref<1x20x128xf32, #tpu.memory_space<vmem>>, %arg3: memref<1x24x128xf32, #tpu.memory_space<vmem>>) attributes {dimension_semantics = [#tpu.dimension_semantics<parallel>], iteration_bounds = array<i64: 2>, scalar_prefetch = 0 : i64, scratch_operands = 1 : i64, tpu.core_type = #tpu.core_type<tc>, window_params = [{transform_indices = @transform_0, window_bounds = array<i64: 1, 3, 16, 16>}, {transform_indices = @transform_1, window_bounds = array<i64: 1, 20, 128>}]} {
    %c0 = arith.constant 0 : index
    %c0_0 = arith.constant 0 : index
    %c0_1 = arith.constant 0 : index
    %c0_2 = arith.constant 0 : index
    %0 = vector.load %arg1[%c0, %c0_0, %c0_1, %c0_2] : memref<1x3x16x16xf32, #tpu.memory_space<vmem>>, vector<1x3x16x16xf32>
    %cst = arith.constant 0.000000e+00 : f32
    %1 = vector.broadcast %cst : f32 to vector<1x4x128xf32>
    %c0_3 = arith.constant 0 : index
    %c0_4 = arith.constant 0 : index
    %c0_5 = arith.constant 0 : index
    %2 = vector.load %arg3[%c0_3, %c0_4, %c0_5] : memref<1x24x128xf32, #tpu.memory_space<vmem>>, vector<1x4x128xf32>
    tpu.vector_store %arg3[%c0_3, %c0_4, %c0_5], %1 {strides = array<i32>} : memref<1x24x128xf32, #tpu.memory_space<vmem>>, vector<1x4x128xf32>,
    %c0_6 = arith.constant 0 : index
    %c20 = arith.constant 20 : index
    %c0_7 = arith.constant 0 : index
    %3 = vector.load %arg3[%c0_6, %c20, %c0_7] : memref<1x24x128xf32, #tpu.memory_space<vmem>>, vector<1x4x128xf32>
    tpu.vector_store %arg3[%c0_6, %c20, %c0_7], %1 {strides = array<i32>} : memref<1x24x128xf32, #tpu.memory_space<vmem>>, vector<1x4x128xf32>,
    %cst_8 = arith.constant 0.000000e+00 : f32
    %4 = vector.broadcast %cst_8 : f32 to vector<1x16x4xf32>
    %c0_9 = arith.constant 0 : index
    %c4 = arith.constant 4 : index
    %c0_10 = arith.constant 0 : index
    %5 = vector.load %arg3[%c0_9, %c4, %c0_10] : memref<1x24x128xf32, #tpu.memory_space<vmem>>, vector<1x16x4xf32>
    tpu.vector_store %arg3[%c0_9, %c4, %c0_10], %4 {strides = array<i32>} : memref<1x24x128xf32, #tpu.memory_space<vmem>>, vector<1x16x4xf32>,
    %c0_11 = arith.constant 0 : index
    %c4_12 = arith.constant 4 : index
    %c20_13 = arith.constant 20 : index
    %6 = vector.load %arg3[%c0_11, %c4_12, %c20_13] : memref<1x24x128xf32, #tpu.memory_space<vmem>>, vector<1x16x4xf32>
    tpu.vector_store %arg3[%c0_11, %c4_12, %c20_13], %4 {strides = array<i32>} : memref<1x24x128xf32, #tpu.memory_space<vmem>>, vector<1x16x4xf32>,
    %7 = vector.extract_strided_slice %0 {offsets = [0, 0, 0, 0], sizes = [1, 1, 16, 16], strides = [1, 1, 1, 1]} : vector<1x3x16x16xf32> to vector<1x1x16x16xf32>
    %8 = vector.shape_cast %7 : vector<1x1x16x16xf32> to vector<1x16x16xf32>
    %c0_14 = arith.constant 0 : index
    %c4_15 = arith.constant 4 : index
    %c4_16 = arith.constant 4 : index
    %9 = vector.load %arg3[%c0_14, %c4_15, %c4_16] : memref<1x24x128xf32, #tpu.memory_space<vmem>>, vector<1x16x16xf32>
    tpu.vector_store %arg3[%c0_14, %c4_15, %c4_16], %8 {strides = array<i32>} : memref<1x24x128xf32, #tpu.memory_space<vmem>>, vector<1x16x16xf32>,
    %c0_17 = arith.constant 0 : index
    %c4_18 = arith.constant 4 : index
    %c24 = arith.constant 24 : index
    %10 = vector.load %arg3[%c0_17, %c4_18, %c24] : memref<1x24x128xf32, #tpu.memory_space<vmem>>, vector<1x16x4xf32>
    tpu.vector_store %arg3[%c0_17, %c4_18, %c24], %4 {strides = array<i32>} : memref<1x24x128xf32, #tpu.memory_space<vmem>>, vector<1x16x4xf32>,
    %c0_19 = arith.constant 0 : index
    %c4_20 = arith.constant 4 : index
    %c44 = arith.constant 44 : index
    %11 = vector.load %arg3[%c0_19, %c4_20, %c44] : memref<1x24x128xf32, #tpu.memory_space<vmem>>, vector<1x16x4xf32>
    tpu.vector_store %arg3[%c0_19, %c4_20, %c44], %4 {strides = array<i32>} : memref<1x24x128xf32, #tpu.memory_space<vmem>>, vector<1x16x4xf32>,
    %12 = vector.extract_strided_slice %0 {offsets = [0, 1, 0, 0], sizes = [1, 1, 16, 16], strides = [1, 1, 1, 1]} : vector<1x3x16x16xf32> to vector<1x1x16x16xf32>
    %13 = vector.shape_cast %12 : vector<1x1x16x16xf32> to vector<1x16x16xf32>
    %c0_21 = arith.constant 0 : index
    %c4_22 = arith.constant 4 : index
    %c28 = arith.constant 28 : index
    %14 = vector.load %arg3[%c0_21, %c4_22, %c28] : memref<1x24x128xf32, #tpu.memory_space<vmem>>, vector<1x16x16xf32>
    tpu.vector_store %arg3[%c0_21, %c4_22, %c28], %13 {strides = array<i32>} : memref<1x24x128xf32, #tpu.memory_space<vmem>>, vector<1x16x16xf32>,
    %c0_23 = arith.constant 0 : index
    %c4_24 = arith.constant 4 : index
    %c48 = arith.constant 48 : index
    %15 = vector.load %arg3[%c0_23, %c4_24, %c48] : memref<1x24x128xf32, #tpu.memory_space<vmem>>, vector<1x16x4xf32>
    tpu.vector_store %arg3[%c0_23, %c4_24, %c48], %4 {strides = array<i32>} : memref<1x24x128xf32, #tpu.memory_space<vmem>>, vector<1x16x4xf32>,
    %c0_25 = arith.constant 0 : index
    %c4_26 = arith.constant 4 : index
    %c68 = arith.constant 68 : index
    %16 = vector.load %arg3[%c0_25, %c4_26, %c68] : memref<1x24x128xf32, #tpu.memory_space<vmem>>, vector<1x16x4xf32>
    tpu.vector_store %arg3[%c0_25, %c4_26, %c68], %4 {strides = array<i32>} : memref<1x24x128xf32, #tpu.memory_space<vmem>>, vector<1x16x4xf32>,
    %17 = vector.extract_strided_slice %0 {offsets = [0, 2, 0, 0], sizes = [1, 1, 16, 16], strides = [1, 1, 1, 1]} : vector<1x3x16x16xf32> to vector<1x1x16x16xf32>
    %18 = vector.shape_cast %17 : vector<1x1x16x16xf32> to vector<1x16x16xf32>
    %c0_27 = arith.constant 0 : index
    %c4_28 = arith.constant 4 : index
    %c52 = arith.constant 52 : index
    %19 = vector.load %arg3[%c0_27, %c4_28, %c52] : memref<1x24x128xf32, #tpu.memory_space<vmem>>, vector<1x16x16xf32>
    tpu.vector_store %arg3[%c0_27, %c4_28, %c52], %18 {strides = array<i32>} : memref<1x24x128xf32, #tpu.memory_space<vmem>>, vector<1x16x16xf32>,
    %c0_29 = arith.constant 0 : index
    %c2 = arith.constant 2 : index
    %c0_30 = arith.constant 0 : index
    %20 = vector.load %arg3[%c0_29, %c2, %c0_30] : memref<1x24x128xf32, #tpu.memory_space<vmem>>, vector<1x20x128xf32>
    %cst_31 = arith.constant 0.479438305 : f32
    %21 = vector.broadcast %cst_31 : f32 to vector<1x20x128xf32>
    %22 = arith.mulf %21, %20 : vector<1x20x128xf32>
    %c0_32 = arith.constant 0 : index
    %c1 = arith.constant 1 : index
    %c0_33 = arith.constant 0 : index
    %23 = vector.load %arg3[%c0_32, %c1, %c0_33] : memref<1x24x128xf32, #tpu.memory_space<vmem>>, vector<1x20x128xf32>
    %c0_34 = arith.constant 0 : index
    %c3 = arith.constant 3 : index
    %c0_35 = arith.constant 0 : index
    %24 = vector.load %arg3[%c0_34, %c3, %c0_35] : memref<1x24x128xf32, #tpu.memory_space<vmem>>, vector<1x20x128xf32>
    %25 = arith.addf %23, %24 : vector<1x20x128xf32>
    %cst_36 = arith.constant 0.233367682 : f32
    %26 = vector.broadcast %cst_36 : f32 to vector<1x20x128xf32>
    %27 = arith.mulf %26, %25 : vector<1x20x128xf32>
    %28 = arith.addf %22, %27 : vector<1x20x128xf32>
    %c0_37 = arith.constant 0 : index
    %c0_38 = arith.constant 0 : index
    %c0_39 = arith.constant 0 : index
    %29 = vector.load %arg3[%c0_37, %c0_38, %c0_39] : memref<1x24x128xf32, #tpu.memory_space<vmem>>, vector<1x20x128xf32>
    %c0_40 = arith.constant 0 : index
    %c4_41 = arith.constant 4 : index
    %c0_42 = arith.constant 0 : index
    %30 = vector.load %arg3[%c0_40, %c4_41, %c0_42] : memref<1x24x128xf32, #tpu.memory_space<vmem>>, vector<1x20x128xf32>
    %31 = arith.addf %29, %30 : vector<1x20x128xf32>
    %cst_43 = arith.constant 0.0269131567 : f32
    %32 = vector.broadcast %cst_43 : f32 to vector<1x20x128xf32>
    %33 = arith.mulf %32, %31 : vector<1x20x128xf32>
    %34 = arith.addf %28, %33 : vector<1x20x128xf32>
    %cst_44 = arith.constant 0.479438305 : f32
    %35 = vector.broadcast %cst_44 : f32 to vector<1x20x128xf32>
    %36 = arith.mulf %35, %34 : vector<1x20x128xf32>
    %c1_i32 = arith.constant 1 : i32
    %37 = tpu.dynamic_rotate %34 by %c1_i32 dim 2 : vector<1x20x128xf32>, i32 -> vector<1x20x128xf32>
    %c127_i32 = arith.constant 127 : i32
    %38 = tpu.dynamic_rotate %34 by %c127_i32 dim 2 : vector<1x20x128xf32>, i32 -> vector<1x20x128xf32>
    %39 = arith.addf %37, %38 : vector<1x20x128xf32>
    %cst_45 = arith.constant 0.233367682 : f32
    %40 = vector.broadcast %cst_45 : f32 to vector<1x20x128xf32>
    %41 = arith.mulf %40, %39 : vector<1x20x128xf32>
    %42 = arith.addf %36, %41 : vector<1x20x128xf32>
    %c2_i32 = arith.constant 2 : i32
    %43 = tpu.dynamic_rotate %34 by %c2_i32 dim 2 : vector<1x20x128xf32>, i32 -> vector<1x20x128xf32>
    %c126_i32 = arith.constant 126 : i32
    %44 = tpu.dynamic_rotate %34 by %c126_i32 dim 2 : vector<1x20x128xf32>, i32 -> vector<1x20x128xf32>
    %45 = arith.addf %43, %44 : vector<1x20x128xf32>
    %cst_46 = arith.constant 0.0269131567 : f32
    %46 = vector.broadcast %cst_46 : f32 to vector<1x20x128xf32>
    %47 = arith.mulf %46, %45 : vector<1x20x128xf32>
    %48 = arith.addf %42, %47 : vector<1x20x128xf32>
    %c0_47 = arith.constant 0 : index
    %c0_48 = arith.constant 0 : index
    %c0_49 = arith.constant 0 : index
    %49 = vector.load %arg2[%c0_47, %c0_48, %c0_49] : memref<1x20x128xf32, #tpu.memory_space<vmem>>, vector<1x20x128xf32>
    tpu.vector_store %arg2[%c0_47, %c0_48, %c0_49], %48 {strides = array<i32>} : memref<1x20x128xf32, #tpu.memory_space<vmem>>, vector<1x20x128xf32>,
    return
  }
  func.func @transform_0(%arg0: i32) -> (i32, i32, i32, i32) {
    %c0_i32 = arith.constant 0 : i32
    %c0_i32_0 = arith.constant 0 : i32
    %c0_i32_1 = arith.constant 0 : i32
    %c0_i32_2 = arith.constant 0 : i32
    return %arg0, %c0_i32, %c0_i32_0, %c0_i32_1 : i32, i32, i32, i32
  }
  func.func @transform_1(%arg0: i32) -> (i32, i32, i32) {
    %c0_i32 = arith.constant 0 : i32
    %c0_i32_0 = arith.constant 0 : i32
    %c0_i32_1 = arith.constant 0 : i32
    return %arg0, %c0_i32, %c0_i32_0 : i32, i32, i32
  }
}

</mosaic_0001>

<llo_original>
// kernel: tpu_custom_call.1
$region0: #{tpu_custom_call.1}
  #allocation0 [shape = 'u32[]', space=smem, size = 0x4, offset = 0x4, fixed_abs, tag = 'smem constant byte address 0x4 - core index']
  #allocation1 [shape = 'u32[144,128]{1,0:T(1,128)}', space=vmem, size = 0x12000, scoped, tag = 'internal scratch']
  #allocation2 [shape = 'f32[1,24,128]{2,1,0:T(8,128)}', space=vmem, size = 0x3000, scoped, tag = 'scratch operand']
  %s0 = inlined_call_operand.hbm [shape: f32[2,3,16,16], index: 0, kind: input, shape index: {}]
  %s1 = inlined_call_operand.vmem [shape: f32[2,20,128], index: 1, kind: output, shape index: {}]
  %s2 = sld [smem:[#allocation0]]
  $region41: #{tpu_custom_call.1} parent=0
    _
  %s4 = ssub.s32 1, %s2
  %s5 = scalar_select 0, %s4, %s2
  $region1: #{tpu_custom_call.1} parent=0
    #allocation3 [shape = 'u8[49152]{0}', space=vmem, size = 0xc000, scoped, tag = 'input window, operand 0']
    #allocation4 [shape = 's32[2]{0}', space=sflag, size = 0x8, scoped, tag = 'scoped memory for tpu_custom_call.1']
    %6 = vsyncpa [#allocation4], 0
    %s7 = scalar_lea.sflag [#allocation4], 1
    %8 = vsyncpa %s7, 0
    loop: start=0, step=1, limit=4
    $region2: #{tpu_custom_call.1} parent=1 // loop_pre_header
      _
    $region3: #{tpu_custom_call.1} parent=1 // loop_header
      %s10 = sphi 0, %s14
      %p11 = scmp.ge.s32.totalorder %s10, 4
      %s20 = sphi 0, %s22
      %s23 = sphi 0, %s20
      %s24 = sphi 0, %s23
      %s40 = sphi 0, %s24
      %s46 = sphi 0, %s48
      %s49 = sphi 0, %s46
      %s50 = sphi 0, %s49
      %s66 = sphi 0, %s50
    $region4: #{tpu_custom_call.1} parent=1 // loop_header_branch
      %13 = sbr.rel (%p11) target = $region8
    $region5: #{tpu_custom_call.1} parent=1 // loop_body
      %s15 = ssub.s32 %s10, 1
      %s16 = ssub.s32 %s10, 2
      %s17 = sadd.s32 %s10, 1
      %s18 = ssub.s32 %s10, %s17
      %p19 = scmp.eq.s32.totalorder %s18, 0
      %s21 = sadd.s32 %s20, 1
      %s22 = scalar_select %p19, %s20, %s21
      %p25 = pneg %p19
      %p26 = scmp.eq.s32.totalorder %s10, 1
      %p27 = por %p25, %p26
      %p28 = scmp.ne.s32.totalorder %s20, %s23
      %p29 = scmp.eq.s32.totalorder %s10, 0
      %p30 = por %p28, %p29
      %p31 = scmp.ne.s32.totalorder %s20, %s23
      %p32 = scmp.eq.s32.totalorder %s15, 1
      %p33 = por %p31, %p32
      %p34 = scmp.ne.s32.totalorder %s23, %s24
      %p35 = scmp.eq.s32.totalorder %s15, 0
      %p36 = por %p34, %p35
      %p37 = scmp.ne.s32.totalorder %s23, %s24
      %p38 = scmp.eq.s32.totalorder %s16, 1
      %p39 = por %p37, %p38
      %p41 = scmp.ne.s32.totalorder %s24, %s40
      %p42 = scmp.eq.s32.totalorder %s16, 0
      %p43 = por %p41, %p42
      %s44 = ssub.s32 %s10, %s17
      %p45 = scmp.eq.s32.totalorder %s44, 0
      %s47 = sadd.s32 %s46, 1
      %s48 = scalar_select %p45, %s46, %s47
      %p51 = pneg %p45
      %p52 = scmp.eq.s32.totalorder %s10, 1
      %p53 = por %p51, %p52
      %p54 = scmp.ne.s32.totalorder %s46, %s49
      %p55 = scmp.eq.s32.totalorder %s10, 0
      %p56 = por %p54, %p55
      %p57 = scmp.ne.s32.totalorder %s46, %s49
      %p58 = scmp.eq.s32.totalorder %s15, 1
      %p59 = por %p57, %p58
      %p60 = scmp.ne.s32.totalorder %s49, %s50
      %p61 = scmp.eq.s32.totalorder %s15, 0
      %p62 = por %p60, %p61
      %p63 = scmp.ne.s32.totalorder %s49, %s50
      %p64 = scmp.eq.s32.totalorder %s16, 1
      %p65 = por %p63, %p64
      %p67 = scmp.ne.s32.totalorder %s50, %s66
      %p68 = scmp.eq.s32.totalorder %s16, 0
      %p69 = por %p67, %p68
      %p70 = scmp.le.s32.totalorder 1, %s10
      %p71 = scmp.lt.s32.totalorder %s10, 3
      %p72 = pnand %p70, %p71
      %p73 = pneg %p72
      // Predicated region
      $region9: #{tpu_custom_call.1} parent=5 // pred_check
        _
      $region10: #{tpu_custom_call.1} parent=5 // pred_check_branch
        %75 = sbr.rel (%p72) target = $region12
      $region11: #{tpu_custom_call.1} parent=5 // pred_region
        %s76 = ssub.s32 %s10, 1
      $region12: #{tpu_custom_call.1} parent=5 // pred_fallthru
        _
      %p77 = scmp.lt.s32.totalorder %s10, 2
      // Predicated region
      $region13: #{tpu_custom_call.1} parent=5 // pred_check
        %p78 = pneg %p77
      $region14: #{tpu_custom_call.1} parent=5 // pred_check_branch
        %80 = sbr.rel (%p78) target = $region16
      $region15: #{tpu_custom_call.1} parent=5 // pred_region
        // Predicated region
        $region17: #{tpu_custom_call.1} parent=15 // pred_check
          %p81 = pneg %p30
        $region18: #{tpu_custom_call.1} parent=15 // pred_check_branch
          %83 = sbr.rel (%p81) target = $region20
        $region19: #{tpu_custom_call.1} parent=15 // pred_region
          %s84 = sand.u32 %s20, 1
          %s85 = scalar_lea.sflag [#allocation4], %s84
          %s86 = sand.u32 %s20, 1
          %s87 = smul.addr %s86, 48
          %s88 = scalar_lea.vmem [#allocation3], %s87
          %s90 = ssub.s32 768, 768
          %91 = vsyncadd %s85, %s90
          %s92 = smul.addr %s10, 6
          %s93 = smul.addr %s92, 128
          %s94 = scalar_lea.hbm %s0, %s93
          %s95 = sshll.u32 %s88, 4
          %s96 = int_to_ptr.vmem [resolvable:$true] %s95
          %101 = dma.hbm_to_vmem [thread:$0]  %s94, 768, %s96, %s85, 128, 128, 8
        $region20: #{tpu_custom_call.1} parent=15 // pred_fallthru
          _
      $region16: #{tpu_custom_call.1} parent=5 // pred_fallthru
        _
      %p102 = scmp.le.s32.totalorder 1, %s10
      %p103 = scmp.lt.s32.totalorder %s10, 3
      %p104 = pnand %p102, %p103
      %p105 = pneg %p104
      // Predicated region
      $region21: #{tpu_custom_call.1} parent=5 // pred_check
        _
      $region22: #{tpu_custom_call.1} parent=5 // pred_check_branch
        %107 = sbr.rel (%p104) target = $region24
      $region23: #{tpu_custom_call.1} parent=5 // pred_region
        %s108 = ssub.s32 %s10, 1
        %s109 = sand.u32 %s23, 1
        %s110 = scalar_lea.sflag [#allocation4], %s109
        %s111 = sand.u32 %s23, 1
        %s112 = smul.addr %s111, 48
        %s113 = scalar_lea.vmem [#allocation3], %s112
        // Predicated region
        $region25: #{tpu_custom_call.1} parent=23 // pred_check
          %p114 = pneg %p36
        $region26: #{tpu_custom_call.1} parent=23 // pred_check_branch
          %116 = sbr.rel (%p114) target = $region28
        $region27: #{tpu_custom_call.1} parent=23 // pred_region
          %117 = dma.done %s110, 768
        $region28: #{tpu_custom_call.1} parent=23 // pred_fallthru
          _
        %s118 = sand.u32 %s23, 1
        %s119 = scalar_lea.sflag [#allocation4], %s118
        %s120 = sand.u32 %s23, 1
        %s121 = smul.addr %s120, 48
        %s122 = scalar_lea.vmem [#allocation3], %s121
        %p123 = pneg %p36
        %p124 = pneg %p33
        %p125 = pneg %p62
        %p126 = pneg %p59
        %p127 = scmp.lt.s32.totalorder %s15, 1
        %s128 = scalar_select %p127, %s15, 1
        %s129 = smul.addr %s128, 3
        %s130 = smul.addr %s129, 8
        %s131 = scalar_lea.vmem %s1, %s130
        %p132 = scmp.lt.s32.totalorder %s15, 1
        %s133 = scalar_select %p132, %s15, 1
        %s134 = smul.addr %s133, 3
        %s135 = smul.addr %s134, 8
        %s136 = scalar_lea.vmem %s1, %s135
        %v137 = vld [vmem:[%s113] sm:$0xff]
        %v138 = vld [vmem:[%s113 + $0x8] sm:$0xff]
        %v139 = vld [vmem:[%s113 + $0x10] sm:$0xff]
        %v140 = vld [vmem:[%s113 + $0x18] sm:$0xff]
        %v141 = vld [vmem:[%s113 + $0x20] sm:$0xff]
        %v142 = vld [vmem:[%s113 + $0x28] sm:$0xff]
        %143 = vst [vmem:[#allocation2] sm:$0xf] 0.0
        %144 = vst [vmem:[#allocation2 + $0x14] sm:$0xf] 0.0
        %vm145 = vcmask 31744
        %146 = vst.msk [vmem:[#allocation2 + $0x4] sm:$0xff] %vm145, 0.0
        %147 = vst.msk [vmem:[#allocation2 + $0xc] sm:$0xff] %vm145, 0.0
        %vm148 = vcmask 195744
        %149 = vst.msk [vmem:[#allocation2 + $0x4] sm:$0xff] %vm148, 0.0
        %150 = vst.msk [vmem:[#allocation2 + $0xc] sm:$0xff] %vm148, 0.0
        %153 = vrot.lane.b32.xlu0 %v137, 4
        %v154 = vpop.permute.xlu0 %153
        %155 = vrot.lane.b32.xlu0 %v138, 4
        %v156 = vpop.permute.xlu0 %155
        %vm159 = vcmask 162848
        %160 = vst.msk [vmem:[#allocation2 + $0x4] sm:$0xff] %vm159, %v154
        %161 = vst.msk [vmem:[#allocation2 + $0xc] sm:$0xff] %vm159, %v156
        %vm162 = vcmask 228544
        %163 = vst.msk [vmem:[#allocation2 + $0x4] sm:$0xff] %vm162, 0.0
        %164 = vst.msk [vmem:[#allocation2 + $0xc] sm:$0xff] %vm162, 0.0
        %vm165 = vcmask 392544
        %166 = vst.msk [vmem:[#allocation2 + $0x4] sm:$0xff] %vm165, 0.0
        %167 = vst.msk [vmem:[#allocation2 + $0xc] sm:$0xff] %vm165, 0.0
        %170 = vrot.lane.b32.xlu0 %v139, 28
        %v171 = vpop.permute.xlu0 %170
        %172 = vrot.lane.b32.xlu0 %v140, 28
        %v173 = vpop.permute.xlu0 %172
        %vm176 = vcmask 359648
        %177 = vst.msk [vmem:[#allocation2 + $0x4] sm:$0xff] %vm176, %v171
        %178 = vst.msk [vmem:[#allocation2 + $0xc] sm:$0xff] %vm176, %v173
        %vm179 = vcmask 425344
        %180 = vst.msk [vmem:[#allocation2 + $0x4] sm:$0xff] %vm179, 0.0
        %181 = vst.msk [vmem:[#allocation2 + $0xc] sm:$0xff] %vm179, 0.0
        %vm182 = vcmask 589344
        %183 = vst.msk [vmem:[#allocation2 + $0x4] sm:$0xff] %vm182, 0.0
        %184 = vst.msk [vmem:[#allocation2 + $0xc] sm:$0xff] %vm182, 0.0
        %187 = vrot.lane.b32.xlu0 %v141, 52
        %v188 = vpop.permute.xlu0 %187
        %189 = vrot.lane.b32.xlu0 %v142, 52
        %v190 = vpop.permute.xlu0 %189
        %vm193 = vcmask 556448
        %194 = vst.msk [vmem:[#allocation2 + $0x4] sm:$0xff] %vm193, %v188
        %195 = vst.msk [vmem:[#allocation2 + $0xc] sm:$0xff] %vm193, %v190
        %v196 = vld [vmem:[#allocation2 + $0x2] sm:$0xff]
        %v197 = vld [vmem:[#allocation2 + $0xa] sm:$0xff]
        %v198 = vld [vmem:[#allocation2 + $0x12] sm:$0xf]
        %v199 = vmul.f32 %v196, 0.4794383
        %v200 = vmul.f32 %v197, 0.4794383
        %v201 = vmul.f32 %v198, 0.4794383
        %v202 = vld [vmem:[#allocation2 + $0x1] sm:$0xff]
        %v203 = vld [vmem:[#allocation2 + $0x9] sm:$0xff]
        %v204 = vld [vmem:[#allocation2 + $0x11] sm:$0xf]
        %v205 = vld [vmem:[#allocation2 + $0x3] sm:$0xff]
        %v206 = vld [vmem:[#allocation2 + $0xb] sm:$0xff]
        %v207 = vld [vmem:[#allocation2 + $0x13] sm:$0xf]
        %v208 = vadd.f32 %v202, %v205
        %v209 = vadd.f32 %v203, %v206
        %v210 = vadd.f32 %v204, %v207
        %v211 = vmul.f32 %v208, 0.23336768
        %v212 = vmul.f32 %v209, 0.23336768
        %v213 = vmul.f32 %v210, 0.23336768
        %v214 = vadd.f32 %v199, %v211
        %v215 = vadd.f32 %v200, %v212
        %v216 = vadd.f32 %v201, %v213
        %v217 = vld [vmem:[#allocation2] sm:$0xff]
        %v218 = vld [vmem:[#allocation2 + $0x8] sm:$0xff]
        %v219 = vld [vmem:[#allocation2 + $0x10] sm:$0xf]
        %v220 = vld [vmem:[#allocation2 + $0x4] sm:$0xff]
        %v221 = vld [vmem:[#allocation2 + $0xc] sm:$0xff]
        %v222 = vld [vmem:[#allocation2 + $0x14] sm:$0xf]
        %v223 = vadd.f32 %v217, %v220
        %v224 = vadd.f32 %v218, %v221
        %v225 = vadd.f32 %v219, %v222
        %v226 = vmul.f32 %v223, 0.026913157
        %v227 = vmul.f32 %v224, 0.026913157
        %v228 = vmul.f32 %v225, 0.026913157
        %v229 = vadd.f32 %v214, %v226
        %v230 = vadd.f32 %v215, %v227
        %v231 = vadd.f32 %v216, %v228
        %v232 = vmul.f32 %v229, 0.4794383
        %v233 = vmul.f32 %v230, 0.4794383
        %v234 = vmul.f32 %v231, 0.4794383
        %235 = vrot.lane.b32.xlu0 %v229, 1
        %v236 = vpop.permute.xlu0 %235
        %237 = vrot.lane.b32.xlu0 %v230, 1
        %v238 = vpop.permute.xlu0 %237
        %239 = vrot.lane.b32.xlu0 %v231, 1
        %v240 = vpop.permute.xlu0 %239
        %241 = vrot.lane.b32.xlu0 %v229, 127
        %v242 = vpop.permute.xlu0 %241
        %243 = vrot.lane.b32.xlu0 %v230, 127
        %v244 = vpop.permute.xlu0 %243
        %245 = vrot.lane.b32.xlu0 %v231, 127
        %v246 = vpop.permute.xlu0 %245
        %v247 = vadd.f32 %v236, %v242
        %v248 = vadd.f32 %v238, %v244
        %v249 = vadd.f32 %v240, %v246
        %v250 = vmul.f32 %v247, 0.23336768
        %v251 = vmul.f32 %v248, 0.23336768
        %v252 = vmul.f32 %v249, 0.23336768
        %v253 = vadd.f32 %v232, %v250
        %v254 = vadd.f32 %v233, %v251
        %v255 = vadd.f32 %v234, %v252
        %256 = vrot.lane.b32.xlu0 %v229, 2
        %v257 = vpop.permute.xlu0 %256
        %258 = vrot.lane.b32.xlu0 %v230, 2
        %v259 = vpop.permute.xlu0 %258
        %260 = vrot.lane.b32.xlu0 %v231, 2
        %v261 = vpop.permute.xlu0 %260
        %262 = vrot.lane.b32.xlu0 %v229, 126
        %v263 = vpop.permute.xlu0 %262
        %264 = vrot.lane.b32.xlu0 %v230, 126
        %v265 = vpop.permute.xlu0 %264
        %266 = vrot.lane.b32.xlu0 %v231, 126
        %v267 = vpop.permute.xlu0 %266
        %v268 = vadd.f32 %v257, %v263
        %v269 = vadd.f32 %v259, %v265
        %v270 = vadd.f32 %v261, %v267
        %v271 = vmul.f32 %v268, 0.026913157
        %v272 = vmul.f32 %v269, 0.026913157
        %v273 = vmul.f32 %v270, 0.026913157
        %v274 = vadd.f32 %v253, %v271
        %v275 = vadd.f32 %v254, %v272
        %v276 = vadd.f32 %v255, %v273
        %277 = vst [vmem:[%s136] sm:$0xff] %v274
        %278 = vst [vmem:[%s136 + $0x8] sm:$0xff] %v275
        %279 = vst [vmem:[%s136 + $0x10] sm:$0xf] %v276
        %p280 = scmp.lt.s32.totalorder %s15, 1
        %s281 = scalar_select %p280, %s15, 1
        %s282 = smul.addr %s281, 3
        %s283 = smul.addr %s282, 8
        %s284 = scalar_lea.vmem %s1, %s283
        // Predicated region
        $region29: #{tpu_custom_call.1} parent=23 // pred_check
          %p285 = pneg %p59
        $region30: #{tpu_custom_call.1} parent=23 // pred_check_branch
          %287 = sbr.rel (%p285) target = $region32
        $region31: #{tpu_custom_call.1} parent=23 // pred_region
          _
        $region32: #{tpu_custom_call.1} parent=23 // pred_fallthru
          _
      $region24: #{tpu_custom_call.1} parent=5 // pred_fallthru
        _
      %p288 = scmp.le.s32.totalorder 2, %s10
      // Predicated region
      $region33: #{tpu_custom_call.1} parent=5 // pred_check
        %p289 = pneg %p288
      $region34: #{tpu_custom_call.1} parent=5 // pred_check_branch
        %291 = sbr.rel (%p289) target = $region36
      $region35: #{tpu_custom_call.1} parent=5 // pred_region
        %s292 = ssub.s32 %s10, 2
        // Predicated region
        $region37: #{tpu_custom_call.1} parent=35 // pred_check
          %p293 = pneg %p65
        $region38: #{tpu_custom_call.1} parent=35 // pred_check_branch
          %295 = sbr.rel (%p293) target = $region40
        $region39: #{tpu_custom_call.1} parent=35 // pred_region
          %p296 = scmp.lt.s32.totalorder %s16, 1
          %s297 = scalar_select %p296, %s16, 1
          %s298 = smul.addr %s297, 3
          %s299 = smul.addr %s298, 8
          %s300 = scalar_lea.vmem %s1, %s299
        $region40: #{tpu_custom_call.1} parent=35 // pred_fallthru
          _
      $region36: #{tpu_custom_call.1} parent=5 // pred_fallthru
        _
    $region6: #{tpu_custom_call.1} parent=1 // loop_footer
      %s14 = sadd.s32 1, %s10
    $region7: #{tpu_custom_call.1} parent=1 // loop_footer_branch
      %9 = sbr.rel target = $region3
    $region8: #{tpu_custom_call.1} parent=1 // loop_exit
      _
    %301 = vsyncpa [#allocation4], 1
    %s302 = scalar_lea.sflag [#allocation4], 1
    %303 = vsyncpa %s302, 1

</llo_original>
